<compile_context>
chip_gen: v6e
topology: v6e:2x2x1
jax: 0.10.0
libtpu: 0.0.40
codegen_flags: <defaults>
</compile_context>

<pallas_src>
import functools

import jax
import jax.numpy as jnp
from jax.experimental import pallas as pl
from jax.experimental.pallas import tpu as pltpu


def _round_up(x, m):
    return ((x + m - 1) // m) * m


def _default_block_b():
    """256 rows fills the v6e/v7x 256-wide MXU; 128 is enough on v5e."""
    try:
        kind = jax.devices()[0].device_kind.lower()
        if "v5 lite" in kind or "v5e" in kind or "v5litepod" in kind:
            return 128
    except Exception:
        pass
    return 256


def _mlp_kernel(x_ref,
                w1_ref, b1_ref,
                w2_ref, b2_ref,
                w3_ref, b3_ref,
                w4_ref, b4_ref,
                o_ref):
    """Four fused linear layers + ReLUs.  bf16 MXU operands, f32 accumulate."""
    x = x_ref[...]                                   # bf16 [bb, in_dim]

    h = jnp.dot(x, w1_ref[...], preferred_element_type=jnp.float32) + b1_ref[...]
    h = jnp.maximum(h, 0.0).astype(jnp.bfloat16)

    h = jnp.dot(h, w2_ref[...], preferred_element_type=jnp.float32) + b2_ref[...]
    h = jnp.maximum(h, 0.0).astype(jnp.bfloat16)

    h = jnp.dot(h, w3_ref[...], preferred_element_type=jnp.float32) + b3_ref[...]
    h = jnp.maximum(h, 0.0).astype(jnp.bfloat16)

    y = jnp.dot(h, w4_ref[...], preferred_element_type=jnp.float32) + b4_ref[...]
    o_ref[...] = y.astype(o_ref.dtype)


@functools.partial(jax.jit, static_argnames=("block_b",))
def mapping_forward(x, params, block_b=None):
    """Forward pass of the 4-layer `mapping` module via a single pallas_call.

    x: [B, input_dim] float32
    params: dict with w1..w4 ([in, out]) and b1..b4 ([1, out]), float32.
    """
    if block_b is None:
        block_b = _default_block_b()

    B, in_dim = x.shape
    hid = params["w1"].shape[1]
    out_dim = params["w4"].shape[1]
    out_dtype = x.dtype

    # Tile size: big enough to fill the MXU M-dimension, clamped for tiny
    # batches; pad the batch to a tile multiple (extra rows are sliced off).
    bb = min(block_b, _round_up(B, 16))
    Bp = _round_up(B, bb)
    if Bp != B:
        x = jnp.pad(x, ((0, Bp - B), (0, 0)))

    # bf16 MXU operands (f32 accumulation inside the kernel). Biases stay f32.
    x_bf = x.astype(jnp.bfloat16)
    w1 = params["w1"].astype(jnp.bfloat16)
    w2 = params["w2"].astype(jnp.bfloat16)
    w3 = params["w3"].astype(jnp.bfloat16)
    w4 = params["w4"].astype(jnp.bfloat16)
    b1, b2, b3, b4 = params["b1"], params["b2"], params["b3"], params["b4"]

    grid = (Bp // bb,)

    def full(shape):
        # Whole-array block: weights/biases resident in VMEM, constant index.
        return pl.BlockSpec(shape, lambda i: tuple(0 for _ in shape))

    in_specs = [
        pl.BlockSpec((bb, in_dim), lambda i: (i, 0)),   # x tile
        full(w1.shape), full(b1.shape),
        full(w2.shape), full(b2.shape),
        full(w3.shape), full(b3.shape),
        full(w4.shape), full(b4.shape),
    ]
    out_spec = pl.BlockSpec((bb, out_dim), lambda i: (i, 0))

    flops = 2 * Bp * (in_dim * hid + hid * hid + hid * hid + hid * out_dim)
    bytes_accessed = (
        Bp * in_dim * 2                                      # x (bf16)
        + (in_dim * hid + 2 * hid * hid + hid * out_dim) * 2  # weights (bf16)
        + (3 * hid + out_dim) * 4                            # biases (f32)
        + Bp * out_dim * 4                                   # output (f32)
    )

    y = pl.pallas_call(
        _mlp_kernel,
        out_shape=jax.ShapeDtypeStruct((Bp, out_dim), out_dtype),
        grid_spec=pltpu.PrefetchScalarGridSpec(
            num_scalar_prefetch=0,
            grid=grid,
            in_specs=in_specs,
            out_specs=out_spec,
        ),
        compiler_params=pltpu.CompilerParams(
            dimension_semantics=("parallel",),
        ),
        cost_estimate=pl.CostEstimate(
            flops=flops, transcendentals=0, bytes_accessed=bytes_accessed),
    )(x_bf,
      w1, b1, w2, b2, w3, b3, w4, b4)

    if Bp != B:
        y = y[:B]
    return y


def init_mapping_params(key, input_dim, hidden_dim, out_dim):
    """Deterministic init mimicking nn.Linear default (uniform +/- 1/sqrt(fan_in))."""
    dims = [(input_dim, hidden_dim),
            (hidden_dim, hidden_dim),
            (hidden_dim, hidden_dim),
            (hidden_dim, out_dim)]
    params = {}
    keys = jax.random.split(key, 2 * len(dims))
    for idx, (fan_in, fan_out) in enumerate(dims):
        bound = 1.0 / jnp.sqrt(jnp.float32(fan_in))
        w = jax.random.uniform(keys[2 * idx], (fan_in, fan_out),
                               minval=-bound, maxval=bound, dtype=jnp.float32)
        b = jax.random.uniform(keys[2 * idx + 1], (1, fan_out),
                               minval=-bound, maxval=bound, dtype=jnp.float32)
        params[f"w{idx + 1}"] = w
        params[f"b{idx + 1}"] = b
    return params


def mapping_reference_f32(x, params):
    """Pure-f32 reference (matches the PyTorch module exactly)."""
    h = jnp.maximum(x @ params["w1"] + params["b1"], 0.0)
    h = jnp.maximum(h @ params["w2"] + params["b2"], 0.0)
    h = jnp.maximum(h @ params["w3"] + params["b3"], 0.0)
    return h @ params["w4"] + params["b4"]


def mapping_reference_bf16(x, params):
    """Mirrors the kernel's bf16-operand / f32-accumulate numerics."""
    bf = jnp.bfloat16
    h = x.astype(bf)
    for i in (1, 2, 3):
        h = jnp.dot(h, params[f"w{i}"].astype(bf),
                    preferred_element_type=jnp.float32) + params[f"b{i}"]
        h = jnp.maximum(h, 0.0).astype(bf)
    return jnp.dot(h, params["w4"].astype(bf),
                   preferred_element_type=jnp.float32) + params["b4"]


if __name__ == "__main__":
    # Small shapes consistent with the module's Linear stack
    # (input -> hidden x3 -> out).  B=12 exercises the pad-to-tile path.
    B, INPUT_DIM, HIDDEN_DIM, OUT_DIM = 12, 256, 256, 256

    key = jax.random.PRNGKey(0)
    k_x, k_p = jax.random.split(key)
    x = jax.random.normal(k_x, (B, INPUT_DIM), dtype=jnp.float32)
    params = init_mapping_params(k_p, INPUT_DIM, HIDDEN_DIM, OUT_DIM)

    y = mapping_forward(x, params)
    y = jax.block_until_ready(y)
    assert y.shape == (B, OUT_DIM)

    # Tight check against a reference that mirrors the kernel's bf16 numerics.
    y_bf16_ref = mapping_reference_bf16(x, params)
    assert jnp.allclose(y, y_bf16_ref, atol=2e-2, rtol=2e-2), \
        "mismatch vs bf16-mirrored reference"

    # Loose sanity check against the exact f32 (PyTorch-equivalent) math.
    y_f32_ref = mapping_reference_f32(x, params)
    assert jnp.allclose(y, y_f32_ref, atol=1e-1, rtol=1e-1), \
        "mismatch vs f32 reference"

    print("KERNEL_OK")
</pallas_src>

<mosaic_0001>
module attributes {stable_mosaic.version = 11 : i64} {
  func.func @_mlp_kernel(%arg0: i32, %arg1: memref<16x256xbf16, #tpu.memory_space<vmem>>, %arg2: memref<256x256xbf16, #tpu.memory_space<vmem>>, %arg3: memref<1x256xf32, #tpu.memory_space<vmem>>, %arg4: memref<256x256xbf16, #tpu.memory_space<vmem>>, %arg5: memref<1x256xf32, #tpu.memory_space<vmem>>, %arg6: memref<256x256xbf16, #tpu.memory_space<vmem>>, %arg7: memref<1x256xf32, #tpu.memory_space<vmem>>, %arg8: memref<256x256xbf16, #tpu.memory_space<vmem>>, %arg9: memref<1x256xf32, #tpu.memory_space<vmem>>, %arg10: memref<16x256xf32, #tpu.memory_space<vmem>>) attributes {dimension_semantics = [#tpu.dimension_semantics<parallel>], iteration_bounds = array<i64: 1>, scalar_prefetch = 0 : i64, scratch_operands = 0 : i64, tpu.core_type = #tpu.core_type<tc>, window_params = [{transform_indices = @transform_0, window_bounds = array<i64: 16, 256>}, {pipeline_mode = #tpu.pipeline_mode<synchronous>, transform_indices = @transform_1, window_bounds = array<i64: 256, 256>}, {pipeline_mode = #tpu.pipeline_mode<synchronous>, transform_indices = @transform_2, window_bounds = array<i64: 1, 256>}, {pipeline_mode = #tpu.pipeline_mode<synchronous>, transform_indices = @transform_3, window_bounds = array<i64: 256, 256>}, {pipeline_mode = #tpu.pipeline_mode<synchronous>, transform_indices = @transform_4, window_bounds = array<i64: 1, 256>}, {pipeline_mode = #tpu.pipeline_mode<synchronous>, transform_indices = @transform_5, window_bounds = array<i64: 256, 256>}, {pipeline_mode = #tpu.pipeline_mode<synchronous>, transform_indices = @transform_6, window_bounds = array<i64: 1, 256>}, {pipeline_mode = #tpu.pipeline_mode<synchronous>, transform_indices = @transform_7, window_bounds = array<i64: 256, 256>}, {pipeline_mode = #tpu.pipeline_mode<synchronous>, transform_indices = @transform_8, window_bounds = array<i64: 1, 256>}, {transform_indices = @transform_9, window_bounds = array<i64: 16, 256>}]} {
    %c0 = arith.constant 0 : index
    %c0_0 = arith.constant 0 : index
    %0 = vector.load %arg1[%c0, %c0_0] : memref<16x256xbf16, #tpu.memory_space<vmem>>, vector<16x256xbf16>
    %c0_1 = arith.constant 0 : index
    %c0_2 = arith.constant 0 : index
    %1 = vector.load %arg2[%c0_1, %c0_2] : memref<256x256xbf16, #tpu.memory_space<vmem>>, vector<256x256xbf16>
    %cst = arith.constant dense<0.000000e+00> : vector<16x256xf32>
    %2 = tpu.matmul %0, %1, %cst {dimension_numbers = #tpu.dot_dimension_numbers<[1], [0], [0], [1], [0, 0, 1, 1], [], []>} : vector<16x256xbf16>, vector<256x256xbf16>, vector<16x256xf32> -> vector<16x256xf32>
    %c0_3 = arith.constant 0 : index
    %c0_4 = arith.constant 0 : index
    %3 = vector.load %arg3[%c0_3, %c0_4] : memref<1x256xf32, #tpu.memory_space<vmem>>, vector<1x256xf32>
    %4 = vector.broadcast %3 : vector<1x256xf32> to vector<16x256xf32>
    %5 = arith.addf %2, %4 : vector<16x256xf32>
    %cst_5 = arith.constant 0.000000e+00 : f32
    %6 = vector.broadcast %cst_5 : f32 to vector<16x256xf32>
    %7 = arith.maximumf %5, %6 : vector<16x256xf32>
    %8 = arith.truncf %7 : vector<16x256xf32> to vector<16x256xbf16>
    %c0_6 = arith.constant 0 : index
    %c0_7 = arith.constant 0 : index
    %9 = vector.load %arg4[%c0_6, %c0_7] : memref<256x256xbf16, #tpu.memory_space<vmem>>, vector<256x256xbf16>
    %cst_8 = arith.constant dense<0.000000e+00> : vector<16x256xf32>
    %10 = tpu.matmul %8, %9, %cst_8 {dimension_numbers = #tpu.dot_dimension_numbers<[1], [0], [0], [1], [0, 0, 1, 1], [], []>} : vector<16x256xbf16>, vector<256x256xbf16>, vector<16x256xf32> -> vector<16x256xf32>
    %c0_9 = arith.constant 0 : index
    %c0_10 = arith.constant 0 : index
    %11 = vector.load %arg5[%c0_9, %c0_10] : memref<1x256xf32, #tpu.memory_space<vmem>>, vector<1x256xf32>
    %12 = vector.broadcast %11 : vector<1x256xf32> to vector<16x256xf32>
    %13 = arith.addf %10, %12 : vector<16x256xf32>
    %cst_11 = arith.constant 0.000000e+00 : f32
    %14 = vector.broadcast %cst_11 : f32 to vector<16x256xf32>
    %15 = arith.maximumf %13, %14 : vector<16x256xf32>
    %16 = arith.truncf %15 : vector<16x256xf32> to vector<16x256xbf16>
    %c0_12 = arith.constant 0 : index
    %c0_13 = arith.constant 0 : index
    %17 = vector.load %arg6[%c0_12, %c0_13] : memref<256x256xbf16, #tpu.memory_space<vmem>>, vector<256x256xbf16>
    %cst_14 = arith.constant dense<0.000000e+00> : vector<16x256xf32>
    %18 = tpu.matmul %16, %17, %cst_14 {dimension_numbers = #tpu.dot_dimension_numbers<[1], [0], [0], [1], [0, 0, 1, 1], [], []>} : vector<16x256xbf16>, vector<256x256xbf16>, vector<16x256xf32> -> vector<16x256xf32>
    %c0_15 = arith.constant 0 : index
    %c0_16 = arith.constant 0 : index
    %19 = vector.load %arg7[%c0_15, %c0_16] : memref<1x256xf32, #tpu.memory_space<vmem>>, vector<1x256xf32>
    %20 = vector.broadcast %19 : vector<1x256xf32> to vector<16x256xf32>
    %21 = arith.addf %18, %20 : vector<16x256xf32>
    %cst_17 = arith.constant 0.000000e+00 : f32
    %22 = vector.broadcast %cst_17 : f32 to vector<16x256xf32>
    %23 = arith.maximumf %21, %22 : vector<16x256xf32>
    %24 = arith.truncf %23 : vector<16x256xf32> to vector<16x256xbf16>
    %c0_18 = arith.constant 0 : index
    %c0_19 = arith.constant 0 : index
    %25 = vector.load %arg8[%c0_18, %c0_19] : memref<256x256xbf16, #tpu.memory_space<vmem>>, vector<256x256xbf16>
    %cst_20 = arith.constant dense<0.000000e+00> : vector<16x256xf32>
    %26 = tpu.matmul %24, %25, %cst_20 {dimension_numbers = #tpu.dot_dimension_numbers<[1], [0], [0], [1], [0, 0, 1, 1], [], []>} : vector<16x256xbf16>, vector<256x256xbf16>, vector<16x256xf32> -> vector<16x256xf32>
    %c0_21 = arith.constant 0 : index
    %c0_22 = arith.constant 0 : index
    %27 = vector.load %arg9[%c0_21, %c0_22] : memref<1x256xf32, #tpu.memory_space<vmem>>, vector<1x256xf32>
    %28 = vector.broadcast %27 : vector<1x256xf32> to vector<16x256xf32>
    %29 = arith.addf %26, %28 : vector<16x256xf32>
    %c0_23 = arith.constant 0 : index
    %c0_24 = arith.constant 0 : index
    %30 = vector.load %arg10[%c0_23, %c0_24] : memref<16x256xf32, #tpu.memory_space<vmem>>, vector<16x256xf32>
    tpu.vector_store %arg10[%c0_23, %c0_24], %29 {strides = array<i32>} : memref<16x256xf32, #tpu.memory_space<vmem>>, vector<16x256xf32>,
    return
  }
  func.func @transform_0(%arg0: i32) -> (i32, i32) {
    %c0_i32 = arith.constant 0 : i32
    %c0_i32_0 = arith.constant 0 : i32
    return %arg0, %c0_i32 : i32, i32
  }
  func.func @transform_1(%arg0: i32) -> (i32, i32) {
    %c0_i32 = arith.constant 0 : i32
    %c0_i32_0 = arith.constant 0 : i32
    %c0_i32_1 = arith.constant 0 : i32
    return %c0_i32, %c0_i32_0 : i32, i32
  }
  func.func @transform_2(%arg0: i32) -> (i32, i32) {
    %c0_i32 = arith.constant 0 : i32
    %c0_i32_0 = arith.constant 0 : i32
    %c0_i32_1 = arith.constant 0 : i32
    return %c0_i32, %c0_i32_0 : i32, i32
  }
  func.func @transform_3(%arg0: i32) -> (i32, i32) {
    %c0_i32 = arith.constant 0 : i32
    %c0_i32_0 = arith.constant 0 : i32
    %c0_i32_1 = arith.constant 0 : i32
    return %c0_i32, %c0_i32_0 : i32, i32
  }
  func.func @transform_4(%arg0: i32) -> (i32, i32) {
    %c0_i32 = arith.constant 0 : i32
    %c0_i32_0 = arith.constant 0 : i32
    %c0_i32_1 = arith.constant 0 : i32
    return %c0_i32, %c0_i32_0 : i32, i32
  }
  func.func @transform_5(%arg0: i32) -> (i32, i32) {
    %c0_i32 = arith.constant 0 : i32
    %c0_i32_0 = arith.constant 0 : i32
    %c0_i32_1 = arith.constant 0 : i32
    return %c0_i32, %c0_i32_0 : i32, i32
  }
  func.func @transform_6(%arg0: i32) -> (i32, i32) {
    %c0_i32 = arith.constant 0 : i32
    %c0_i32_0 = arith.constant 0 : i32
    %c0_i32_1 = arith.constant 0 : i32
    return %c0_i32, %c0_i32_0 : i32, i32
  }
  func.func @transform_7(%arg0: i32) -> (i32, i32) {
    %c0_i32 = arith.constant 0 : i32
    %c0_i32_0 = arith.constant 0 : i32
    %c0_i32_1 = arith.constant 0 : i32
    return %c0_i32, %c0_i32_0 : i32, i32
  }
  func.func @transform_8(%arg0: i32) -> (i32, i32) {
    %c0_i32 = arith.constant 0 : i32
    %c0_i32_0 = arith.constant 0 : i32
    %c0_i32_1 = arith.constant 0 : i32
    return %c0_i32, %c0_i32_0 : i32, i32
  }
  func.func @transform_9(%arg0: i32) -> (i32, i32) {
    %c0_i32 = arith.constant 0 : i32
    %c0_i32_0 = arith.constant 0 : i32
    return %arg0, %c0_i32 : i32, i32
  }
}

</mosaic_0001>

<llo_original>
// kernel: mapping_forward.1
$region0: #{mapping_forward.1}
  #allocation0 [shape = 'u32[]', space=smem, size = 0x4, offset = 0x4, fixed_abs, tag = 'smem constant byte address 0x4 - core index']
  #allocation1 [shape = 'u32[144,128]{1,0:T(1,128)}', space=vmem, size = 0x12000, scoped, tag = 'internal scratch']
  %s0 = inlined_call_operand.vmem [shape: bf16[16,256], index: 0, kind: input, shape index: {}]
  %s1 = inlined_call_operand.vmem [shape: bf16[256,256], index: 1, kind: input, shape index: {}]
  %s2 = inlined_call_operand.vmem [shape: f32[1,256], index: 2, kind: input, shape index: {}]
  %s3 = inlined_call_operand.vmem [shape: bf16[256,256], index: 3, kind: input, shape index: {}]
  %s4 = inlined_call_operand.vmem [shape: f32[1,256], index: 4, kind: input, shape index: {}]
  %s5 = inlined_call_operand.vmem [shape: bf16[256,256], index: 5, kind: input, shape index: {}]
  %s6 = inlined_call_operand.vmem [shape: f32[1,256], index: 6, kind: input, shape index: {}]
  %s7 = inlined_call_operand.vmem [shape: bf16[256,256], index: 7, kind: input, shape index: {}]
  %s8 = inlined_call_operand.vmem [shape: f32[1,256], index: 8, kind: input, shape index: {}]
  %s9 = inlined_call_operand.hbm [shape: f32[16,256], index: 9, kind: output, shape index: {}]
  %s10 = sld [smem:[#allocation0]]
  $region46: #{mapping_forward.1} parent=0
    _
  %s12 = ssub.s32 1, %s10
  %s13 = scalar_select 0, %s12, %s10
  $region1: #{mapping_forward.1} parent=0
    #allocation2 [shape = 'u8[16384]{0}', space=vmem, size = 0x4000, scoped, tag = 'output window, operand 0, single buffered']
    #allocation3 [shape = 's32[1]{0}', space=sflag, size = 0x4, scoped, tag = 'scoped memory for mapping_forward.1']
    %14 = vsyncpa [#allocation3], 0
    // Predicated region
    $region2: #{mapping_forward.1} parent=1 // pred_check
      _
    $region3: #{mapping_forward.1} parent=1 // pred_check_branch
      %16 = sbr.rel (0) target = $region5
    $region4: #{mapping_forward.1} parent=1 // pred_region
      _
    $region5: #{mapping_forward.1} parent=1 // pred_fallthru
      _
    // Predicated region
    $region6: #{mapping_forward.1} parent=1 // pred_check
      _
    $region7: #{mapping_forward.1} parent=1 // pred_check_branch
      %18 = sbr.rel (0) target = $region9
    $region8: #{mapping_forward.1} parent=1 // pred_region
      _
    $region9: #{mapping_forward.1} parent=1 // pred_fallthru
      _
    // Predicated region
    $region10: #{mapping_forward.1} parent=1 // pred_check
      _
    $region11: #{mapping_forward.1} parent=1 // pred_check_branch
      %20 = sbr.rel (0) target = $region13
    $region12: #{mapping_forward.1} parent=1 // pred_region
      _
    $region13: #{mapping_forward.1} parent=1 // pred_fallthru
      _
    // Predicated region
    $region14: #{mapping_forward.1} parent=1 // pred_check
      _
    $region15: #{mapping_forward.1} parent=1 // pred_check_branch
      %22 = sbr.rel (0) target = $region17
    $region16: #{mapping_forward.1} parent=1 // pred_region
      _
    $region17: #{mapping_forward.1} parent=1 // pred_fallthru
      _
    // Predicated region
    $region18: #{mapping_forward.1} parent=1 // pred_check
      _
    $region19: #{mapping_forward.1} parent=1 // pred_check_branch
      %24 = sbr.rel (0) target = $region21
    $region20: #{mapping_forward.1} parent=1 // pred_region
      _
    $region21: #{mapping_forward.1} parent=1 // pred_fallthru
      _
    // Predicated region
    $region22: #{mapping_forward.1} parent=1 // pred_check
      _
    $region23: #{mapping_forward.1} parent=1 // pred_check_branch
      %26 = sbr.rel (0) target = $region25
    $region24: #{mapping_forward.1} parent=1 // pred_region
      _
    $region25: #{mapping_forward.1} parent=1 // pred_fallthru
      _
    // Predicated region
    $region26: #{mapping_forward.1} parent=1 // pred_check
      _
    $region27: #{mapping_forward.1} parent=1 // pred_check_branch
      %28 = sbr.rel (0) target = $region29
    $region28: #{mapping_forward.1} parent=1 // pred_region
      _
    $region29: #{mapping_forward.1} parent=1 // pred_fallthru
      _
    // Predicated region
    $region30: #{mapping_forward.1} parent=1 // pred_check
      _
    $region31: #{mapping_forward.1} parent=1 // pred_check_branch
      %30 = sbr.rel (0) target = $region33
    $region32: #{mapping_forward.1} parent=1 // pred_region
      _
    $region33: #{mapping_forward.1} parent=1 // pred_fallthru
      _
    // Predicated region
    $region34: #{mapping_forward.1} parent=1 // pred_check
      _
    $region35: #{mapping_forward.1} parent=1 // pred_check_branch
      %32 = sbr.rel (0) target = $region37
    $region36: #{mapping_forward.1} parent=1 // pred_region
      _
    $region37: #{mapping_forward.1} parent=1 // pred_fallthru
      _
    %v33 = vld [vmem:[%s0] sm:$0xff]
    %v34 = vld [vmem:[%s0 + $0x8] sm:$0xff]
    %v35 = vld [vmem:[%s1] sm:$0xff]
    %v36 = vld [vmem:[%s1 + $0x8] sm:$0xff]
    %v37 = vld [vmem:[%s1 + $0x10] sm:$0xff]
    %v38 = vld [vmem:[%s1 + $0x18] sm:$0xff]
    %v39 = vld [vmem:[%s1 + $0x20] sm:$0xff]
    %v40 = vld [vmem:[%s1 + $0x28] sm:$0xff]
    %v41 = vld [vmem:[%s1 + $0x30] sm:$0xff]
    %v42 = vld [vmem:[%s1 + $0x38] sm:$0xff]
    %v43 = vld [vmem:[%s1 + $0x40] sm:$0xff]
    %v44 = vld [vmem:[%s1 + $0x48] sm:$0xff]
    %v45 = vld [vmem:[%s1 + $0x50] sm:$0xff]
    %v46 = vld [vmem:[%s1 + $0x58] sm:$0xff]
    %v47 = vld [vmem:[%s1 + $0x60] sm:$0xff]
    %v48 = vld [vmem:[%s1 + $0x68] sm:$0xff]
    %v49 = vld [vmem:[%s1 + $0x70] sm:$0xff]
    %v50 = vld [vmem:[%s1 + $0x78] sm:$0xff]
    %v51 = vld [vmem:[%s1 + $0x80] sm:$0xff]
    %v52 = vld [vmem:[%s1 + $0x88] sm:$0xff]
    %v53 = vld [vmem:[%s1 + $0x90] sm:$0xff]
    %v54 = vld [vmem:[%s1 + $0x98] sm:$0xff]
    %v55 = vld [vmem:[%s1 + $0xa0] sm:$0xff]
    %v56 = vld [vmem:[%s1 + $0xa8] sm:$0xff]
    %v57 = vld [vmem:[%s1 + $0xb0] sm:$0xff]
    %v58 = vld [vmem:[%s1 + $0xb8] sm:$0xff]
    %v59 = vld [vmem:[%s1 + $0xc0] sm:$0xff]
    %v60 = vld [vmem:[%s1 + $0xc8] sm:$0xff]
    %v61 = vld [vmem:[%s1 + $0xd0] sm:$0xff]
    %v62 = vld [vmem:[%s1 + $0xd8] sm:$0xff]
    %v63 = vld [vmem:[%s1 + $0xe0] sm:$0xff]
    %v64 = vld [vmem:[%s1 + $0xe8] sm:$0xff]
    %v65 = vld [vmem:[%s1 + $0xf0] sm:$0xff]
    %v66 = vld [vmem:[%s1 + $0xf8] sm:$0xff]
    %v67 = vld [vmem:[%s2] sm:$0x3]
    %v69 = vlaneseq
    %v70 = vshrl.u32 %v69, 7
    %v71 = vsub.s32 0, %v70
    %v72 = vrot.slane %v67, %v71
    %v73 = vlaneseq
    %v74 = vshrl.u32 %v73, 7
    %v75 = vsub.s32 1, %v74
    %v76 = vrot.slane %v67, %v75
    %v81 = vunpack.c.l.b16 %v33
    %v82 = vunpack.c.h.b16 %v33
    %v83 = vunpack.c.l.b16 %v34
    %v84 = vunpack.c.h.b16 %v34
    %v85 = vpack.c.b16 %v83, %v81
    %v86 = vpack.c.b16 %v84, %v82
    %v121 = vunpack.c.l.b16 %v35
    %v122 = vunpack.c.h.b16 %v35
    %v123 = vunpack.c.l.b16 %v36
    %v124 = vunpack.c.h.b16 %v36
    %v125 = vunpack.c.l.b16 %v37
    %v126 = vunpack.c.h.b16 %v37
    %v127 = vunpack.c.l.b16 %v38
    %v128 = vunpack.c.h.b16 %v38
    %v129 = vunpack.c.l.b16 %v39
    %v130 = vunpack.c.h.b16 %v39
    %v131 = vunpack.c.l.b16 %v40
    %v132 = vunpack.c.h.b16 %v40
    %v133 = vunpack.c.l.b16 %v41
    %v134 = vunpack.c.h.b16 %v41
    %v135 = vunpack.c.l.b16 %v42
    %v136 = vunpack.c.h.b16 %v42
    %v137 = vunpack.c.l.b16 %v43
    %v138 = vunpack.c.h.b16 %v43
    %v139 = vunpack.c.l.b16 %v44
    %v140 = vunpack.c.h.b16 %v44
    %v141 = vunpack.c.l.b16 %v45
    %v142 = vunpack.c.h.b16 %v45
    %v143 = vunpack.c.l.b16 %v46
    %v144 = vunpack.c.h.b16 %v46
    %v145 = vunpack.c.l.b16 %v47
    %v146 = vunpack.c.h.b16 %v47
    %v147 = vunpack.c.l.b16 %v48
    %v148 = vunpack.c.h.b16 %v48
    %v149 = vunpack.c.l.b16 %v49
    %v150 = vunpack.c.h.b16 %v49
    %v151 = vunpack.c.l.b16 %v50
    %v152 = vunpack.c.h.b16 %v50
    %v153 = vunpack.c.l.b16 %v51
    %v154 = vunpack.c.h.b16 %v51
    %v155 = vunpack.c.l.b16 %v52
    %v156 = vunpack.c.h.b16 %v52
    %v157 = vunpack.c.l.b16 %v53
    %v158 = vunpack.c.h.b16 %v53
    %v159 = vunpack.c.l.b16 %v54
    %v160 = vunpack.c.h.b16 %v54
    %v161 = vunpack.c.l.b16 %v55
    %v162 = vunpack.c.h.b16 %v55
    %v163 = vunpack.c.l.b16 %v56
    %v164 = vunpack.c.h.b16 %v56
    %v165 = vunpack.c.l.b16 %v57
    %v166 = vunpack.c.h.b16 %v57
    %v167 = vunpack.c.l.b16 %v58
    %v168 = vunpack.c.h.b16 %v58
    %v169 = vunpack.c.l.b16 %v59
    %v170 = vunpack.c.h.b16 %v59
    %v171 = vunpack.c.l.b16 %v60
    %v172 = vunpack.c.h.b16 %v60
    %v173 = vunpack.c.l.b16 %v61
    %v174 = vunpack.c.h.b16 %v61
    %v175 = vunpack.c.l.b16 %v62
    %v176 = vunpack.c.h.b16 %v62
    %v177 = vunpack.c.l.b16 %v63
    %v178 = vunpack.c.h.b16 %v63
    %v179 = vunpack.c.l.b16 %v64
    %v180 = vunpack.c.h.b16 %v64
    %v181 = vunpack.c.l.b16 %v65
    %v182 = vunpack.c.h.b16 %v65
    %v183 = vunpack.c.l.b16 %v66
    %v184 = vunpack.c.h.b16 %v66
    %v185 = vpack.c.b16 %v123, %v121
    %v186 = vpack.c.b16 %v124, %v122
    %v187 = vpack.c.b16 %v127, %v125
    %v188 = vpack.c.b16 %v128, %v126
    %v189 = vpack.c.b16 %v131, %v129
    %v190 = vpack.c.b16 %v132, %v130
    %v191 = vpack.c.b16 %v135, %v133
    %v192 = vpack.c.b16 %v136, %v134
    %v193 = vpack.c.b16 %v139, %v137
    %v194 = vpack.c.b16 %v140, %v138
    %v195 = vpack.c.b16 %v143, %v141
    %v196 = vpack.c.b16 %v144, %v142
    %v197 = vpack.c.b16 %v147, %v145
    %v198 = vpack.c.b16 %v148, %v146
    %v199 = vpack.c.b16 %v151, %v149
    %v200 = vpack.c.b16 %v152, %v150
    %v201 = vpack.c.b16 %v155, %v153
    %v202 = vpack.c.b16 %v156, %v154
    %v203 = vpack.c.b16 %v159, %v157
    %v204 = vpack.c.b16 %v160, %v158
    %v205 = vpack.c.b16 %v163, %v161
    %v206 = vpack.c.b16 %v164, %v162
    %v207 = vpack.c.b16 %v167, %v165
    %v208 = vpack.c.b16 %v168, %v166
    %v209 = vpack.c.b16 %v171, %v169
    %v210 = vpack.c.b16 %v172, %v170
    %v211 = vpack.c.b16 %v175, %v173
    %v212 = vpack.c.b16 %v176, %v174
    %v213 = vpack.c.b16 %v179, %v177
    %v214 = vpack.c.b16 %v180, %v178
    %v215 = vpack.c.b16 %v183, %v181
    %v216 = vpack.c.b16 %v184, %v182
    %249 = vmatprep.subr.bf16.mxu0 %v200
    %250 = vmatpush1.bf16.msra.mxu0 %v199
    %251 = vmatprep.subr.bf16.mxu0 %v198
    %252 = vmatpush1.bf16.msra.mxu0 %v197
    %253 = vmatprep.subr.bf16.mxu0 %v196
    %254 = vmatpush1.bf16.msra.mxu0 %v195
    %255 = vmatprep.subr.bf16.mxu0 %v194
    %256 = vmatpush1.bf16.msra.mxu0 %v193
    %257 = vmatprep.subr.bf16.mxu0 %v192
    %258 = vmatpush1.bf16.msra.mxu0 %v191
    %259 = vmatprep.subr.bf16.mxu0 %v190
    %260 = vmatpush1.bf16.msra.mxu0 %v189
    %261 = vmatprep.subr.bf16.mxu0 %v188
    %262 = vmatpush1.bf16.msra.mxu0 %v187
    %263 = vmatprep.subr.bf16.mxu0 %v186
    %264 = vmatpush1.bf16.msra.mxu0 %v185
    %265 = vmatprep.subr.bf16.mxu0 %v216
    %266 = vmatpush2.bf16.msra.mxu0 %v215
    %267 = vmatprep.subr.bf16.mxu0 %v214
    %268 = vmatpush2.bf16.msra.mxu0 %v213
    %269 = vmatprep.subr.bf16.mxu0 %v212
    %270 = vmatpush2.bf16.msra.mxu0 %v211
    %271 = vmatprep.subr.bf16.mxu0 %v210
    %272 = vmatpush2.bf16.msra.mxu0 %v209
    %273 = vmatprep.subr.bf16.mxu0 %v208
    %274 = vmatpush2.bf16.msra.mxu0 %v207
    %275 = vmatprep.subr.bf16.mxu0 %v206
    %276 = vmatpush2.bf16.msra.mxu0 %v205
    %277 = vmatprep.subr.bf16.mxu0 %v204
    %278 = vmatpush2.bf16.msra.mxu0 %v203
    %279 = vmatprep.subr.bf16.mxu0 %v202
    %280 = vmatpush2.bf16.msra.mxu0 %v201
    %281 = vmatprep.mubr.bf16.mxu0 %v86
    %282 = vmatmul.mubr.bf16.gmra.mxu0 %v85
    %v283 = vpop.f32.mrf.mxu0
    %v284 = vadd.f32 %v72, %v283
    %v285 = vpop.f32.mrf.mxu0
    %v286 = vadd.f32 %v76, %v285
    %v287 = vpop.f32.mrf.mxu0
    %v288 = vadd.f32 %v72, %v287
    %v289 = vpop.f32.mrf.mxu0
    %v290 = vadd.f32 %v76, %v289
    %291 = vdwg.mxu0
    %v292 = vmax.f32 %v284, 0.0
    %v293 = vmax.f32 %v286, 0.0
    %v294 = vmax.f32 %v288, 0.0
    %v295 = vmax.f32 %v290, 0.0
    %v296 = vpack.c.bf16 %v294, %v292
    %v297 = vpack.c.bf16 %v295, %v293
    %v298 = vld [vmem:[%s3] sm:$0xff]
    %v299 = vld [vmem:[%s3 + $0x8] sm:$0xff]
    %v300 = vld [vmem:[%s3 + $0x10] sm:$0xff]
    %v301 = vld [vmem:[%s3 + $0x18] sm:$0xff]
    %v302 = vld [vmem:[%s3 + $0x20] sm:$0xff]
    %v303 = vld [vmem:[%s3 + $0x28] sm:$0xff]
    %v304 = vld [vmem:[%s3 + $0x30] sm:$0xff]
    %v305 = vld [vmem:[%s3 + $0x38] sm:$0xff]
    %v306 = vld [vmem:[%s3 + $0x40] sm:$0xff]
    %v307 = vld [vmem:[%s3 + $0x48] sm:$0xff]
    %v308 = vld [vmem:[%s3 + $0x50] sm:$0xff]
    %v309 = vld [vmem:[%s3 + $0x58] sm:$0xff]
    %v310 = vld [vmem:[%s3 + $0x60] sm:$0xff]
    %v311 = vld [vmem:[%s3 + $0x68] sm:$0xff]
    %v312 = vld [vmem:[%s3 + $0x70] sm:$0xff]
    %v313 = vld [vmem:[%s3 + $0x78] sm:$0xff]
    %v314 = vld [vmem:[%s3 + $0x80] sm:$0xff]
    %v315 = vld [vmem:[%s3 + $0x88] sm:$0xff]
    %v316 = vld [vmem:[%s3 + $0x90] sm:$0xff]
    %v317 = vld [vmem:[%s3 + $0x98] sm:$0xff]
    %v318 = vld [vmem:[%s3 + $0xa0] sm:$0xff]
    %v319 = vld [vmem:[%s3 + $0xa8] sm:$0xff]
    %v320 = vld [vmem:[%s3 + $0xb0] sm:$0xff]
    %v321 = vld [vmem:[%s3 + $0xb8] sm:$0xff]
    %v322 = vld [vmem:[%s3 + $0xc0] sm:$0xff]
    %v323 = vld [vmem:[%s3 + $0xc8] sm:$0xff]
    %v324 = vld [vmem:[%s3 + $0xd0] sm:$0xff]
    %v325 = vld [vmem:[%s3 + $0xd8] sm:$0xff]
    %v326 = vld [vmem:[%s3 + $0xe0] sm:$0xff]
    %v327 = vld [vmem:[%s3 + $0xe8] sm:$0xff]
    %v328 = vld [vmem:[%s3 + $0xf0] sm:$0xff]
    %v329 = vld [vmem:[%s3 + $0xf8] sm:$0xff]
    %v330 = vld [vmem:[%s4] sm:$0x3]
    %v332 = vlaneseq
    %v333 = vshrl.u32 %v332, 7
    %v334 = vsub.s32 0, %v333
    %v335 = vrot.slane %v330, %v334
    %v336 = vlaneseq
    %v337 = vshrl.u32 %v336, 7
    %v338 = vsub.s32 1, %v337
    %v339 = vrot.slane %v330, %v338
    %v374 = vunpack.c.l.b16 %v298
    %v375 = vunpack.c.h.b16 %v298
    %v376 = vunpack.c.l.b16 %v299
    %v377 = vunpack.c.h.b16 %v299
    %v378 = vunpack.c.l.b16 %v300
    %v379 = vunpack.c.h.b16 %v300
    %v380 = vunpack.c.l.b16 %v301
    %v381 = vunpack.c.h.b16 %v301
    %v382 = vunpack.c.l.b16 %v302
    %v383 = vunpack.c.h.b16 %v302
    %v384 = vunpack.c.l.b16 %v303
    %v385 = vunpack.c.h.b16 %v303
    %v386 = vunpack.c.l.b16 %v304
    %v387 = vunpack.c.h.b16 %v304
    %v388 = vunpack.c.l.b16 %v305
    %v389 = vunpack.c.h.b16 %v305
    %v390 = vunpack.c.l.b16 %v306
    %v391 = vunpack.c.h.b16 %v306
    %v392 = vunpack.c.l.b16 %v307
    %v393 = vunpack.c.h.b16 %v307
    %v394 = vunpack.c.l.b16 %v308
    %v395 = vunpack.c.h.b16 %v308
    %v396 = vunpack.c.l.b16 %v309
    %v397 = vunpack.c.h.b16 %v309
    %v398 = vunpack.c.l.b16 %v310
    %v399 = vunpack.c.h.b16 %v310
    %v400 = vunpack.c.l.b16 %v311
    %v401 = vunpack.c.h.b16 %v311
    %v402 = vunpack.c.l.b16 %v312
    %v403 = vunpack.c.h.b16 %v312
    %v404 = vunpack.c.l.b16 %v313
    %v405 = vunpack.c.h.b16 %v313
    %v406 = vunpack.c.l.b16 %v314
    %v407 = vunpack.c.h.b16 %v314
    %v408 = vunpack.c.l.b16 %v315
    %v409 = vunpack.c.h.b16 %v315
    %v410 = vunpack.c.l.b16 %v316
    %v411 = vunpack.c.h.b16 %v316
    %v412 = vunpack.c.l.b16 %v317
    %v413 = vunpack.c.h.b16 %v317
    %v414 = vunpack.c.l.b16 %v318
    %v415 = vunpack.c.h.b16 %v318
    %v416 = vunpack.c.l.b16 %v319
    %v417 = vunpack.c.h.b16 %v319
    %v418 = vunpack.c.l.b16 %v320
    %v419 = vunpack.c.h.b16 %v320
    %v420 = vunpack.c.l.b16 %v321
    %v421 = vunpack.c.h.b16 %v321
    %v422 = vunpack.c.l.b16 %v322
    %v423 = vunpack.c.h.b16 %v322
    %v424 = vunpack.c.l.b16 %v323
    %v425 = vunpack.c.h.b16 %v323
    %v426 = vunpack.c.l.b16 %v324
    %v427 = vunpack.c.h.b16 %v324
    %v428 = vunpack.c.l.b16 %v325
    %v429 = vunpack.c.h.b16 %v325
    %v430 = vunpack.c.l.b16 %v326
    %v431 = vunpack.c.h.b16 %v326
    %v432 = vunpack.c.l.b16 %v327
    %v433 = vunpack.c.h.b16 %v327
    %v434 = vunpack.c.l.b16 %v328
    %v435 = vunpack.c.h.b16 %v328
    %v436 = vunpack.c.l.b16 %v329
    %v437 = vunpack.c.h.b16 %v329
    %v438 = vpack.c.b16 %v376, %v374
    %v439 = vpack.c.b16 %v377, %v375
    %v440 = vpack.c.b16 %v380, %v378
    %v441 = vpack.c.b16 %v381, %v379
    %v442 = vpack.c.b16 %v384, %v382
    %v443 = vpack.c.b16 %v385, %v383
    %v444 = vpack.c.b16 %v388, %v386
    %v445 = vpack.c.b16 %v389, %v387
    %v446 = vpack.c.b16 %v392, %v390
    %v447 = vpack.c.b16 %v393, %v391
    %v448 = vpack.c.b16 %v396, %v394
    %v449 = vpack.c.b16 %v397, %v395
    %v450 = vpack.c.b16 %v400, %v398
    %v451 = vpack.c.b16 %v401, %v399
    %v452 = vpack.c.b16 %v404, %v402
    %v453 = vpack.c.b16 %v405, %v403
    %v454 = vpack.c.b16 %v408, %v406
    %v455 = vpack.c.b16 %v409, %v407
    %v456 = vpack.c.b16 %v412, %v410
    %v457 = vpack.c.b16 %v413, %v411
    %v458 = vpack.c.b16 %v416, %v414
    %v459 = vpack.c.b16 %v417, %v415
    %v460 = vpack.c.b16 %v420, %v418
    %v461 = vpack.c.b16 %v421, %v419
    %v462 = vpack.c.b16 %v424, %v422
    %v463 = vpack.c.b16 %v425, %v423
    %v464 = vpack.c.b16 %v428, %v426
    %v465 = vpack.c.b16 %v429, %v427
    %v466 = vpack.c.b16 %v432, %v430
    %v467 = vpack.c.b16 %v433, %v431
    %v468 = vpack.c.b16 %v436, %v434
    %v469 = vpack.c.b16 %v437, %v435
    %502 = vmatprep.subr.bf16.mxu0 %v453
    %503 = vmatpush1.bf16.msra.mxu0 %v452
    %504 = vmatprep.subr.bf16.mxu0 %v451
    %505 = vmatpush1.bf16.msra.mxu0 %v450
    %506 = vmatprep.subr.bf16.mxu0 %v449
    %507 = vmatpush1.bf16.msra.mxu0 %v448
    %508 = vmatprep.subr.bf16.mxu0 %v447
    %509 = vmatpush1.bf16.msra.mxu0 %v446
    %510 = vmatprep.subr.bf16.mxu0 %v445
    %511 = vmatpush1.bf16.msra.mxu0 %v444
    %512 = vmatprep.subr.bf16.mxu0 %v443
    %513 = vmatpush1.bf16.msra.mxu0 %v442
    %514 = vmatprep.subr.bf16.mxu0 %v441
    %515 = vmatpush1.bf16.msra.mxu0 %v440
    %516 = vmatprep.subr.bf16.mxu0 %v439
    %517 = vmatpush1.bf16.msra.mxu0 %v438
    %518 = vmatprep.subr.bf16.mxu0 %v469
    %519 = vmatpush2.bf16.msra.mxu0 %v468
    %520 = vmatprep.subr.bf16.mxu0 %v467
    %521 = vmatpush2.bf16.msra.mxu0 %v466
    %522 = vmatprep.subr.bf16.mxu0 %v465
    %523 = vmatpush2.bf16.msra.mxu0 %v464
    %524 = vmatprep.subr.bf16.mxu0 %v463
    %525 = vmatpush2.bf16.msra.mxu0 %v462
    %526 = vmatprep.subr.bf16.mxu0 %v461
    %527 = vmatpush2.bf16.msra.mxu0 %v460
    %528 = vmatprep.subr.bf16.mxu0 %v459
    %529 = vmatpush2.bf16.msra.mxu0 %v458
    %530 = vmatprep.subr.bf16.mxu0 %v457
    %531 = vmatpush2.bf16.msra.mxu0 %v456
    %532 = vmatprep.subr.bf16.mxu0 %v455
    %533 = vmatpush2.bf16.msra.mxu0 %v454
    %534 = vmatprep.mubr.bf16.mxu0 %v297
    %535 = vmatmul.mubr.bf16.gmra.mxu0 %v296
    %v536 = vpop.f32.mrf.mxu0
    %v537 = vadd.f32 %v335, %v536
    %v538 = vpop.f32.mrf.mxu0
    %v539 = vadd.f32 %v339, %v538
    %v540 = vpop.f32.mrf.mxu0
    %v541 = vadd.f32 %v335, %v540
    %v542 = vpop.f32.mrf.mxu0
    %v543 = vadd.f32 %v339, %v542
    %544 = vdwg.mxu0
    %v545 = vmax.f32 %v537, 0.0
    %v546 = vmax.f32 %v539, 0.0
    %v547 = vmax.f32 %v541, 0.0
    %v548 = vmax.f32 %v543, 0.0
    %v549 = vpack.c.bf16 %v547, %v545
    %v550 = vpack.c.bf16 %v548, %v546
    %v551 = vld [vmem:[%s5] sm:$0xff]
    %v552 = vld [vmem:[%s5 + $0x8] sm:$0xff]
    %v553 = vld [vmem:[%s5 + $0x10] sm:$0xff]
    %v554 = vld [vmem:[%s5 + $0x18] sm:$0xff]
    %v555 = vld [vmem:[%s5 + $0x20] sm:$0xff]
    %v556 = vld [vmem:[%s5 + $0x28] sm:$0xff]
    %v557 = vld [vmem:[%s5 + $0x30] sm:$0xff]
    %v558 = vld [vmem:[%s5 + $0x38] sm:$0xff]
    %v559 = vld [vmem:[%s5 + $0x40] sm:$0xff]
    %v560 = vld [vmem:[%s5 + $0x48] sm:$0xff]
    %v561 = vld [vmem:[%s5 + $0x50] sm:$0xff]
    %v562 = vld [vmem:[%s5 + $0x58] sm:$0xff]
    %v563 = vld [vmem:[%s5 + $0x60] sm:$0xff]
    %v564 = vld [vmem:[%s5 + $0x68] sm:$0xff]
    %v565 = vld [vmem:[%s5 + $0x70] sm:$0xff]
    %v566 = vld [vmem:[%s5 + $0x78] sm:$0xff]
    %v567 = vld [vmem:[%s5 + $0x80] sm:$0xff]
    %v568 = vld [vmem:[%s5 + $0x88] sm:$0xff]
    %v569 = vld [vmem:[%s5 + $0x90] sm:$0xff]
    %v570 = vld [vmem:[%s5 + $0x98] sm:$0xff]
    %v571 = vld [vmem:[%s5 + $0xa0] sm:$0xff]
    %v572 = vld [vmem:[%s5 + $0xa8] sm:$0xff]
    %v573 = vld [vmem:[%s5 + $0xb0] sm:$0xff]
    %v574 = vld [vmem:[%s5 + $0xb8] sm:$0xff]
    %v575 = vld [vmem:[%s5 + $0xc0] sm:$0xff]
    %v576 = vld [vmem:[%s5 + $0xc8] sm:$0xff]
    %v577 = vld [vmem:[%s5 + $0xd0] sm:$0xff]
    %v578 = vld [vmem:[%s5 + $0xd8] sm:$0xff]
    %v579 = vld [vmem:[%s5 + $0xe0] sm:$0xff]
    %v580 = vld [vmem:[%s5 + $0xe8] sm:$0xff]
    %v581 = vld [vmem:[%s5 + $0xf0] sm:$0xff]
    %v582 = vld [vmem:[%s5 + $0xf8] sm:$0xff]
    %v583 = vld [vmem:[%s6] sm:$0x3]
    %v585 = vlaneseq
    %v586 = vshrl.u32 %v585, 7
    %v587 = vsub.s32 0, %v586
    %v588 = vrot.slane %v583, %v587
    %v589 = vlaneseq
    %v590 = vshrl.u32 %v589, 7
    %v591 = vsub.s32 1, %v590
    %v592 = vrot.slane %v583, %v591
    %v627 = vunpack.c.l.b16 %v551
    %v628 = vunpack.c.h.b16 %v551
    %v629 = vunpack.c.l.b16 %v552
    %v630 = vunpack.c.h.b16 %v552
    %v631 = vunpack.c.l.b16 %v553
    %v632 = vunpack.c.h.b16 %v553
    %v633 = vunpack.c.l.b16 %v554
    %v634 = vunpack.c.h.b16 %v554
    %v635 = vunpack.c.l.b16 %v555
    %v636 = vunpack.c.h.b16 %v555
    %v637 = vunpack.c.l.b16 %v556
    %v638 = vunpack.c.h.b16 %v556
    %v639 = vunpack.c.l.b16 %v557
    %v640 = vunpack.c.h.b16 %v557
    %v641 = vunpack.c.l.b16 %v558
    %v642 = vunpack.c.h.b16 %v558
    %v643 = vunpack.c.l.b16 %v559
    %v644 = vunpack.c.h.b16 %v559
    %v645 = vunpack.c.l.b16 %v560
    %v646 = vunpack.c.h.b16 %v560
    %v647 = vunpack.c.l.b16 %v561
    %v648 = vunpack.c.h.b16 %v561
    %v649 = vunpack.c.l.b16 %v562
    %v650 = vunpack.c.h.b16 %v562
    %v651 = vunpack.c.l.b16 %v563
    %v652 = vunpack.c.h.b16 %v563
    %v653 = vunpack.c.l.b16 %v564
    %v654 = vunpack.c.h.b16 %v564
    %v655 = vunpack.c.l.b16 %v565
    %v656 = vunpack.c.h.b16 %v565
    %v657 = vunpack.c.l.b16 %v566
    %v658 = vunpack.c.h.b16 %v566
    %v659 = vunpack.c.l.b16 %v567
    %v660 = vunpack.c.h.b16 %v567
    %v661 = vunpack.c.l.b16 %v568
    %v662 = vunpack.c.h.b16 %v568
    %v663 = vunpack.c.l.b16 %v569
    %v664 = vunpack.c.h.b16 %v569
    %v665 = vunpack.c.l.b16 %v570
    %v666 = vunpack.c.h.b16 %v570
    %v667 = vunpack.c.l.b16 %v571
    %v668 = vunpack.c.h.b16 %v571
    %v669 = vunpack.c.l.b16 %v572
    %v670 = vunpack.c.h.b16 %v572
    %v671 = vunpack.c.l.b16 %v573
    %v672 = vunpack.c.h.b16 %v573
    %v673 = vunpack.c.l.b16 %v574
    %v674 = vunpack.c.h.b16 %v574
    %v675 = vunpack.c.l.b16 %v575
    %v676 = vunpack.c.h.b16 %v575
    %v677 = vunpack.c.l.b16 %v576
    %v678 = vunpack.c.h.b16 %v576
    %v679 = vunpack.c.l.b16 %v577
    %v680 = vunpack.c.h.b16 %v577
    %v681 = vunpack.c.l.b16 %v578
    %v682 = vunpack.c.h.b16 %v578
    %v683 = vunpack.c.l.b16 %v579
    %v684 = vunpack.c.h.b16 %v579
    %v685 = vunpack.c.l.b16 %v580
    %v686 = vunpack.c.h.b16 %v580
    %v687 = vunpack.c.l.b16 %v581
    %v688 = vunpack.c.h.b16 %v581
    %v689 = vunpack.c.l.b16 %v582
    %v690 = vunpack.c.h.b16 %v582
    %v691 = vpack.c.b16 %v629, %v627
    %v692 = vpack.c.b16 %v630, %v628
    %v693 = vpack.c.b16 %v633, %v631
    %v694 = vpack.c.b16 %v634, %v632
    %v695 = vpack.c.b16 %v637, %v635
    %v696 = vpack.c.b16 %v638, %v636
    %v697 = vpack.c.b16 %v641, %v639
    %v698 = vpack.c.b16 %v642, %v640
    %v699 = vpack.c.b16 %v645, %v643
    %v700 = vpack.c.b16 %v646, %v644
    %v701 = vpack.c.b16 %v649, %v647
    %v702 = vpack.c.b16 %v650, %v648
    %v703 = vpack.c.b16 %v653, %v651
    %v704 = vpack.c.b16 %v654, %v652
    %v705 = vpack.c.b16 %v657, %v655
    %v706 = vpack.c.b16 %v658, %v656
    %v707 = vpack.c.b16 %v661, %v659
    %v708 = vpack.c.b16 %v662, %v660
    %v709 = vpack.c.b16 %v665, %v663
    %v710 = vpack.c.b16 %v666, %v664
    %v711 = vpack.c.b16 %v669, %v667
    %v712 = vpack.c.b16 %v670, %v668
    %v713 = vpack.c.b16 %v673, %v671
    %v714 = vpack.c.b16 %v674, %v672
    %v715 = vpack.c.b16 %v677, %v675
    %v716 = vpack.c.b16 %v678, %v676
    %v717 = vpack.c.b16 %v681, %v679
    %v718 = vpack.c.b16 %v682, %v680
    %v719 = vpack.c.b16 %v685, %v683
    %v720 = vpack.c.b16 %v686, %v684
    %v721 = vpack.c.b16 %v689, %v687
    %v722 = vpack.c.b16 %v690, %v688
    %755 = vmatprep.subr.bf16.mxu0 %v706
    %756 = vmatpush1.bf16.msra.mxu0 %v705
    %757 = vmatprep.subr.bf16.mxu0 %v704
    %758 = vmatpush1.bf16.msra.mxu0 %v703
    %759 = vmatprep.subr.bf16.mxu0 %v702
    %760 = vmatpush1.bf16.msra.mxu0 %v701
    %761 = vmatprep.subr.bf16.mxu0 %v700
    %762 = vmatpush1.bf16.msra.mxu0 %v699
    %763 = vmatprep.subr.bf16.mxu0 %v698
    %764 = vmatpush1.bf16.msra.mxu0 %v697
    %765 = vmatprep.subr.bf16.mxu0 %v696
    %766 = vmatpush1.bf16.msra.mxu0 %v695
    %767 = vmatprep.subr.bf16.mxu0 %v694
    %768 = vmatpush1.bf16.msra.mxu0 %v693
    %769 = vmatprep.subr.bf16.mxu0 %v692
    %770 = vmatpush1.bf16.msra.mxu0 %v691
    %771 = vmatprep.subr.bf16.mxu0 %v722
    %772 = vmatpush2.bf16.msra.mxu0 %v721
    %773 = vmatprep.subr.bf16.mxu0 %v720
    %774 = vmatpush2.bf16.msra.mxu0 %v719
    %775 = vmatprep.subr.bf16.mxu0 %v718
    %776 = vmatpush2.bf16.msra.mxu0 %v717
    %777 = vmatprep.subr.bf16.mxu0 %v716
    %778 = vmatpush2.bf16.msra.mxu0 %v715
    %779 = vmatprep.subr.bf16.mxu0 %v714
    %780 = vmatpush2.bf16.msra.mxu0 %v713
    %781 = vmatprep.subr.bf16.mxu0 %v712
    %782 = vmatpush2.bf16.msra.mxu0 %v711
    %783 = vmatprep.subr.bf16.mxu0 %v710
    %784 = vmatpush2.bf16.msra.mxu0 %v709
    %785 = vmatprep.subr.bf16.mxu0 %v708
    %786 = vmatpush2.bf16.msra.mxu0 %v707
    %787 = vmatprep.mubr.bf16.mxu0 %v550
    %788 = vmatmul.mubr.bf16.gmra.mxu0 %v549
    %v789 = vpop.f32.mrf.mxu0
    %v790 = vadd.f32 %v588, %v789
    %v791 = vpop.f32.mrf.mxu0
    %v792 = vadd.f32 %v592, %v791
    %v793 = vpop.f32.mrf.mxu0
    %v794 = vadd.f32 %v588, %v793
    %v795 = vpop.f32.mrf.mxu0
    %v796 = vadd.f32 %v592, %v795
    %797 = vdwg.mxu0
    %v798 = vmax.f32 %v790, 0.0
    %v799 = vmax.f32 %v792, 0.0
    %v800 = vmax.f32 %v794, 0.0
    %v801 = vmax.f32 %v796, 0.0
    %v802 = vpack.c.bf16 %v800, %v798
    %v803 = vpack.c.bf16 %v801, %v799
    %v804 = vld [vmem:[%s7] sm:$0xff]
    %v805 = vld [vmem:[%s7 + $0x8] sm:$0xff]
    %v806 = vld [vmem:[%s7 + $0x10] sm:$0xff]
    %v807 = vld [vmem:[%s7 + $0x18] sm:$0xff]
    %v808 = vld [vmem:[%s7 + $0x20] sm:$0xff]
    %v809 = vld [vmem:[%s7 + $0x28] sm:$0xff]
    %v810 = vld [vmem:[%s7 + $0x30] sm:$0xff]
    %v811 = vld [vmem:[%s7 + $0x38] sm:$0xff]
    %v812 = vld [vmem:[%s7 + $0x40] sm:$0xff]
    %v813 = vld [vmem:[%s7 + $0x48] sm:$0xff]
    %v814 = vld [vmem:[%s7 + $0x50] sm:$0xff]
    %v815 = vld [vmem:[%s7 + $0x58] sm:$0xff]
    %v816 = vld [vmem:[%s7 + $0x60] sm:$0xff]
    %v817 = vld [vmem:[%s7 + $0x68] sm:$0xff]
    %v818 = vld [vmem:[%s7 + $0x70] sm:$0xff]
    %v819 = vld [vmem:[%s7 + $0x78] sm:$0xff]
    %v820 = vld [vmem:[%s7 + $0x80] sm:$0xff]
    %v821 = vld [vmem:[%s7 + $0x88] sm:$0xff]
    %v822 = vld [vmem:[%s7 + $0x90] sm:$0xff]
    %v823 = vld [vmem:[%s7 + $0x98] sm:$0xff]
    %v824 = vld [vmem:[%s7 + $0xa0] sm:$0xff]
    %v825 = vld [vmem:[%s7 + $0xa8] sm:$0xff]
    %v826 = vld [vmem:[%s7 + $0xb0] sm:$0xff]
    %v827 = vld [vmem:[%s7 + $0xb8] sm:$0xff]
    %v828 = vld [vmem:[%s7 + $0xc0] sm:$0xff]
    %v829 = vld [vmem:[%s7 + $0xc8] sm:$0xff]
    %v830 = vld [vmem:[%s7 + $0xd0] sm:$0xff]
    %v831 = vld [vmem:[%s7 + $0xd8] sm:$0xff]
    %v832 = vld [vmem:[%s7 + $0xe0] sm:$0xff]
    %v833 = vld [vmem:[%s7 + $0xe8] sm:$0xff]
    %v834 = vld [vmem:[%s7 + $0xf0] sm:$0xff]
    %v835 = vld [vmem:[%s7 + $0xf8] sm:$0xff]
    %v836 = vld [vmem:[%s8] sm:$0x3]
    %v838 = vlaneseq
    %v839 = vshrl.u32 %v838, 7
    %v840 = vsub.s32 0, %v839
    %v841 = vrot.slane %v836, %v840
    %v842 = vlaneseq
    %v843 = vshrl.u32 %v842, 7
    %v844 = vsub.s32 1, %v843
    %v845 = vrot.slane %v836, %v844
    %v880 = vunpack.c.l.b16 %v804
    %v881 = vunpack.c.h.b16 %v804
    %v882 = vunpack.c.l.b16 %v805
    %v883 = vunpack.c.h.b16 %v805
    %v884 = vunpack.c.l.b16 %v806
    %v885 = vunpack.c.h.b16 %v806
    %v886 = vunpack.c.l.b16 %v807
    %v887 = vunpack.c.h.b16 %v807
    %v888 = vunpack.c.l.b16 %v808
    %v889 = vunpack.c.h.b16 %v808
    %v890 = vunpack.c.l.b16 %v809
    %v891 = vunpack.c.h.b16 %v809
    %v892 = vunpack.c.l.b16 %v810
    %v893 = vunpack.c.h.b16 %v810
    %v894 = vunpack.c.l.b16 %v811
    %v895 = vunpack.c.h.b16 %v811
    %v896 = vunpack.c.l.b16 %v812
    %v897 = vunpack.c.h.b16 %v812
    %v898 = vunpack.c.l.b16 %v813
    %v899 = vunpack.c.h.b16 %v813
    %v900 = vunpack.c.l.b16 %v814
    %v901 = vunpack.c.h.b16 %v814
    %v902 = vunpack.c.l.b16 %v815
    %v903 = vunpack.c.h.b16 %v815
    %v904 = vunpack.c.l.b16 %v816
    %v905 = vunpack.c.h.b16 %v816
    %v906 = vunpack.c.l.b16 %v817
    %v907 = vunpack.c.h.b16 %v817
    %v908 = vunpack.c.l.b16 %v818
    %v909 = vunpack.c.h.b16 %v818
    %v910 = vunpack.c.l.b16 %v819
    %v911 = vunpack.c.h.b16 %v819
    %v912 = vunpack.c.l.b16 %v820
    %v913 = vunpack.c.h.b16 %v820
    %v914 = vunpack.c.l.b16 %v821
    %v915 = vunpack.c.h.b16 %v821
    %v916 = vunpack.c.l.b16 %v822
    %v917 = vunpack.c.h.b16 %v822
    %v918 = vunpack.c.l.b16 %v823
    %v919 = vunpack.c.h.b16 %v823
    %v920 = vunpack.c.l.b16 %v824
    %v921 = vunpack.c.h.b16 %v824
    %v922 = vunpack.c.l.b16 %v825
    %v923 = vunpack.c.h.b16 %v825
    %v924 = vunpack.c.l.b16 %v826
    %v925 = vunpack.c.h.b16 %v826
    %v926 = vunpack.c.l.b16 %v827
    %v927 = vunpack.c.h.b16 %v827
    %v928 = vunpack.c.l.b16 %v828
    %v929 = vunpack.c.h.b16 %v828
    %v930 = vunpack.c.l.b16 %v829
    %v931 = vunpack.c.h.b16 %v829
    %v932 = vunpack.c.l.b16 %v830
    %v933 = vunpack.c.h.b16 %v830
    %v934 = vunpack.c.l.b16 %v831
    %v935 = vunpack.c.h.b16 %v831
    %v936 = vunpack.c.l.b16 %v832
    %v937 = vunpack.c.h.b16 %v832
    %v938 = vunpack.c.l.b16 %v833
    %v939 = vunpack.c.h.b16 %v833
    %v940 = vunpack.c.l.b16 %v834
    %v941 = vunpack.c.h.b16 %v834
    %v942 = vunpack.c.l.b16 %v835
    %v943 = vunpack.c.h.b16 %v835
    %v944 = vpack.c.b16 %v882, %v880
    %v945 = vpack.c.b16 %v883, %v881
    %v946 = vpack.c.b16 %v886, %v884
    %v947 = vpack.c.b16 %v887, %v885
    %v948 = vpack.c.b16 %v890, %v888
    %v949 = vpack.c.b16 %v891, %v889
    %v950 = vpack.c.b16 %v894, %v892
    %v951 = vpack.c.b16 %v895, %v893
    %v952 = vpack.c.b16 %v898, %v896
    %v953 = vpack.c.b16 %v899, %v897
    %v954 = vpack.c.b16 %v902, %v900
    %v955 = vpack.c.b16 %v903, %v901
    %v956 = vpack.c.b16 %v906, %v904
    %v957 = vpack.c.b16 %v907, %v905
    %v958 = vpack.c.b16 %v910, %v908
    %v959 = vpack.c.b16 %v911, %v909
    %v960 = vpack.c.b16 %v914, %v912
    %v961 = vpack.c.b16 %v915, %v913
    %v962 = vpack.c.b16 %v918, %v916
    %v963 = vpack.c.b16 %v919, %v917
    %v964 = vpack.c.b16 %v922, %v920
    %v965 = vpack.c.b16 %v923, %v921
    %v966 = vpack.c.b16 %v926, %v924
    %v967 = vpack.c.b16 %v927, %v925
    %v968 = vpack.c.b16 %v930, %v928
    %v969 = vpack.c.b16 %v931, %v929
    %v970 = vpack.c.b16 %v934, %v932
    %v971 = vpack.c.b16 %v935, %v933
    %v972 = vpack.c.b16 %v938, %v936
    %v973 = vpack.c.b16 %v939, %v937
    %v974 = vpack.c.b16 %v942, %v940
    %v975 = vpack.c.b16 %v943, %v941
    %1008 = vmatprep.subr.bf16.mxu0 %v959
    %1009 = vmatpush1.bf16.msra.mxu0 %v958
    %1010 = vmatprep.subr.bf16.mxu0 %v957
    %1011 = vmatpush1.bf16.msra.mxu0 %v956
    %1012 = vmatprep.subr.bf16.mxu0 %v955
    %1013 = vmatpush1.bf16.msra.mxu0 %v954
    %1014 = vmatprep.subr.bf16.mxu0 %v953
    %1015 = vmatpush1.bf16.msra.mxu0 %v952
    %1016 = vmatprep.subr.bf16.mxu0 %v951
    %1017 = vmatpush1.bf16.msra.mxu0 %v950
    %1018 = vmatprep.subr.bf16.mxu0 %v949
    %1019 = vmatpush1.bf16.msra.mxu0 %v948
    %1020 = vmatprep.subr.bf16.mxu0 %v947
    %1021 = vmatpush1.bf16.msra.mxu0 %v946
    %1022 = vmatprep.subr.bf16.mxu0 %v945
    %1023 = vmatpush1.bf16.msra.mxu0 %v944
    %1024 = vmatprep.subr.bf16.mxu0 %v975
    %1025 = vmatpush2.bf16.msra.mxu0 %v974
    %1026 = vmatprep.subr.bf16.mxu0 %v973
    %1027 = vmatpush2.bf16.msra.mxu0 %v972
    %1028 = vmatprep.subr.bf16.mxu0 %v971
    %1029 = vmatpush2.bf16.msra.mxu0 %v970
    %1030 = vmatprep.subr.bf16.mxu0 %v969
    %1031 = vmatpush2.bf16.msra.mxu0 %v968
    %1032 = vmatprep.subr.bf16.mxu0 %v967
    %1033 = vmatpush2.bf16.msra.mxu0 %v966
    %1034 = vmatprep.subr.bf16.mxu0 %v965
    %1035 = vmatpush2.bf16.msra.mxu0 %v964
    %1036 = vmatprep.subr.bf16.mxu0 %v963
    %1037 = vmatpush2.bf16.msra.mxu0 %v962
    %1038 = vmatprep.subr.bf16.mxu0 %v961
    %1039 = vmatpush2.bf16.msra.mxu0 %v960
    %1040 = vmatprep.mubr.bf16.mxu0 %v803
    %1041 = vmatmul.mubr.bf16.gmra.mxu0 %v802
    %v1042 = vpop.f32.mrf.mxu0
    %v1043 = vadd.f32 %v841, %v1042
    %v1044 = vpop.f32.mrf.mxu0
    %v1045 = vadd.f32 %v845, %v1044
    %v1046 = vpop.f32.mrf.mxu0
    %v1047 = vadd.f32 %v841, %v1046
    %v1048 = vpop.f32.mrf.mxu0
    %v1049 = vadd.f32 %v845, %v1048
    %1050 = vdwg.mxu0
    %1051 = vst [vmem:[#allocation2] sm:$0xff] %v1043
    %1052 = vst [vmem:[#allocation2 + $0x8] sm:$0xff] %v1045
    %1053 = vst [vmem:[#allocation2 + $0x10] sm:$0xff] %v1047
    %1054 = vst [vmem:[#allocation2 + $0x18] sm:$0xff] %v1049
    // Predicated region
    $region38: #{mapping_forward.1} parent=1 // pred_check
      _
    $region39: #{mapping_forward.1} parent=1 // pred_check_branch
      %1056 = sbr.rel (0) target = $region41
    $region40: #{mapping_forward.1} parent=1 // pred_region
      %s1058 = ssub.s32 512, 512
      %1059 = vsyncadd [#allocation3], %s1058
      %s1060 = sshll.u32 [#allocation2], 4
      %s1061 = int_to_ptr.vmem [resolvable:$true] %s1060
      %1066 = dma.vmem_to_hbm [thread:$0]  %s1061, 512, %s9, [#allocation3], 256, 256, 16
    $region41: #{mapping_forward.1} parent=1 // pred_fallthru
      _
    // Predicated region
    $region42: #{mapping_forward.1} parent=1 // pred_check
      _
    $region43: #{mapping_forward.1} parent=1 // pred_check_branch
      %1068 = sbr.rel (0) target = $region45
    $region44: #{mapping_forward.1} parent=1 // pred_region
      %1069 = dma.done [#allocation3], 512
    $region45: #{mapping_forward.1} parent=1 // pred_fallthru
      _
    %1070 = vsyncpa [#allocation3], 1

</llo_original>
